<compile_context>
chip_gen: v5e
topology: v5e:2x2
jax: 0.10.0
libtpu: 0.0.40
codegen_flags: <defaults>
</compile_context>

<pallas_src>
import jax
import jax.numpy as jnp
from jax.experimental import pallas as pl
from jax.experimental.pallas import tpu as pltpu

STATE_DIM = 3
ACTION_DIM = 2
HIDDEN = 128


def _actor_kernel(x_ref, w1_ref, b1_ref, w2_ref, b2_ref, w3_ref, b3_ref, out_ref):
    # x: (TB, STATE_DIM). K=3 contraction -> VPU broadcast-FMAs (MXU stays free
    # for fc2/fc3 and we avoid the awkward 3-lane LHS layout).
    x = x_ref[...]
    h1 = (x[:, 0:1] * w1_ref[0:1, :]
          + x[:, 1:2] * w1_ref[1:2, :]
          + x[:, 2:3] * w1_ref[2:3, :]
          + b1_ref[...])
    h1 = jnp.maximum(h1, 0.0)

    h2 = jnp.dot(h1, w2_ref[...], preferred_element_type=jnp.float32)
    h2 = jnp.maximum(h2 + b2_ref[...], 0.0)

    # fc3 weight/bias are zero-padded to 128 output lanes in the wrapper, so this
    # writes a full lane-dense (TB, 128) tile (no masked partial stores).
    out = jnp.dot(h2, w3_ref[...], preferred_element_type=jnp.float32)
    out_ref[...] = (out + b3_ref[...]).astype(out_ref.dtype)


def _round_up(n, m):
    return ((n + m - 1) // m) * m


def actor_forward(state, params, *, tile_b=512):
    """state: (B, STATE_DIM) f32. params: dict of w1,b1,w2,b2,w3,b3 (W stored (in,out))."""
    B = state.shape[0]
    TB = min(tile_b, _round_up(B, 8))           # batch tile, multiple of 8 sublanes
    B_pad = _round_up(B, TB)
    if B_pad != B:
        state = jnp.pad(state, ((0, B_pad - B), (0, 0)))

    w1, b1 = params["w1"], params["b1"]
    w2, b2 = params["w2"], params["b2"]
    w3, b3 = params["w3"], params["b3"]

    # Zero-pad fc3 to 128 output features -> lane-dense kernel output.
    w3p = jnp.pad(w3, ((0, 0), (0, HIDDEN - ACTION_DIM)))
    b3p = jnp.pad(b3, ((0, 0), (0, HIDDEN - ACTION_DIM)))

    grid = (B_pad // TB,)

    def const(shape):
        # Constant index_map -> weights/biases stay VMEM-resident across batch tiles.
        return pl.BlockSpec(shape, lambda i: (0, 0))

    flops = B_pad * (2 * STATE_DIM * HIDDEN + 2 * HIDDEN * HIDDEN
                     + 2 * HIDDEN * HIDDEN)
    bytes_accessed = 4 * (B_pad * STATE_DIM + B_pad * HIDDEN
                          + STATE_DIM * HIDDEN + 2 * HIDDEN * HIDDEN
                          + 3 * HIDDEN)

    out_pad = pl.pallas_call(
        _actor_kernel,
        out_shape=jax.ShapeDtypeStruct((B_pad, HIDDEN), jnp.float32),
        grid=grid,
        in_specs=[
            pl.BlockSpec((TB, STATE_DIM), lambda i: (i, 0)),   # state: batch-tiled
            const((STATE_DIM, HIDDEN)),                        # w1
            const((1, HIDDEN)),                                # b1
            const((HIDDEN, HIDDEN)),                           # w2
            const((1, HIDDEN)),                                # b2
            const((HIDDEN, HIDDEN)),                           # w3 (padded)
            const((1, HIDDEN)),                                # b3 (padded)
        ],
        out_specs=pl.BlockSpec((TB, HIDDEN), lambda i: (i, 0)),
        compiler_params=pltpu.CompilerParams(
            dimension_semantics=("parallel",)),
        cost_estimate=pl.CostEstimate(flops=flops, transcendentals=0,
                                      bytes_accessed=bytes_accessed),
    )(state, w1, b1, w2, b2, w3p, b3p)

    mu = out_pad[:B, :ACTION_DIM]
    # ones_like(fc3(x)) is a constant; produce it in the wrapper, not on-chip.
    ones = jnp.ones_like(mu)
    return mu, ones


def init_params(key):
    """Deterministic init matching the PyTorch layer shapes.

    PyTorch Linear stores weight as (out, in); we store the transpose (in, out),
    so y = x @ W + b matches PyTorch's y = x @ W.T + b exactly.
    """
    ks = jax.random.split(key, 6)

    def linear(kw, kb, fan_in, fan_out):
        bound = 1.0 / jnp.sqrt(jnp.float32(fan_in))
        w = jax.random.uniform(kw, (fan_in, fan_out), jnp.float32, -bound, bound)
        b = jax.random.uniform(kb, (1, fan_out), jnp.float32, -bound, bound)
        return w, b

    w1, b1 = linear(ks[0], ks[1], STATE_DIM, HIDDEN)
    w2, b2 = linear(ks[2], ks[3], HIDDEN, HIDDEN)
    w3, b3 = linear(ks[4], ks[5], HIDDEN, ACTION_DIM)
    return {"w1": w1, "b1": b1, "w2": w2, "b2": b2, "w3": w3, "b3": b3}


def reference_forward(state, p):
    h1 = jnp.maximum(state @ p["w1"] + p["b1"], 0.0)
    h2 = jnp.maximum(h1 @ p["w2"] + p["b2"], 0.0)
    out = h2 @ p["w3"] + p["b3"]
    return out, jnp.ones_like(out)


if __name__ == "__main__":
    key = jax.random.PRNGKey(0)
    kx, kp = jax.random.split(key)
    batch = 8
    state = jax.random.normal(kx, (batch, STATE_DIM), jnp.float32)
    params = init_params(kp)

    mu, ones = actor_forward(state, params)
    mu = jax.block_until_ready(mu)
    ones = jax.block_until_ready(ones)

    ref_mu, ref_ones = reference_forward(state, params)
    assert mu.shape == (batch, ACTION_DIM)
    assert ones.shape == (batch, ACTION_DIM)
    assert jnp.allclose(mu, ref_mu, atol=1e-5, rtol=1e-5)
    assert jnp.allclose(ones, ref_ones)

    print("KERNEL_OK")
</pallas_src>

<mosaic_0001>
module attributes {stable_mosaic.version = 11 : i64} {
  func.func @_actor_kernel(%arg0: i32, %arg1: memref<8x3xf32, #tpu.memory_space<vmem>>, %arg2: memref<3x128xf32, #tpu.memory_space<vmem>>, %arg3: memref<1x128xf32, #tpu.memory_space<vmem>>, %arg4: memref<128x128xf32, #tpu.memory_space<vmem>>, %arg5: memref<1x128xf32, #tpu.memory_space<vmem>>, %arg6: memref<128x128xf32, #tpu.memory_space<vmem>>, %arg7: memref<1x128xf32, #tpu.memory_space<vmem>>, %arg8: memref<8x128xf32, #tpu.memory_space<vmem>>) attributes {dimension_semantics = [#tpu.dimension_semantics<parallel>], iteration_bounds = array<i64: 1>, scalar_prefetch = 0 : i64, scratch_operands = 0 : i64, tpu.core_type = #tpu.core_type<tc>, window_params = [{transform_indices = @transform_0, window_bounds = array<i64: 8, 3>}, {pipeline_mode = #tpu.pipeline_mode<synchronous>, transform_indices = @transform_1, window_bounds = array<i64: 3, 128>}, {pipeline_mode = #tpu.pipeline_mode<synchronous>, transform_indices = @transform_2, window_bounds = array<i64: 1, 128>}, {pipeline_mode = #tpu.pipeline_mode<synchronous>, transform_indices = @transform_3, window_bounds = array<i64: 128, 128>}, {pipeline_mode = #tpu.pipeline_mode<synchronous>, transform_indices = @transform_4, window_bounds = array<i64: 1, 128>}, {pipeline_mode = #tpu.pipeline_mode<synchronous>, transform_indices = @transform_5, window_bounds = array<i64: 128, 128>}, {pipeline_mode = #tpu.pipeline_mode<synchronous>, transform_indices = @transform_6, window_bounds = array<i64: 1, 128>}, {transform_indices = @transform_7, window_bounds = array<i64: 8, 128>}]} {
    %c0 = arith.constant 0 : index
    %c0_0 = arith.constant 0 : index
    %0 = vector.load %arg1[%c0, %c0_0] : memref<8x3xf32, #tpu.memory_space<vmem>>, vector<8x3xf32>
    %1 = vector.extract_strided_slice %0 {offsets = [0, 0], sizes = [8, 1], strides = [1, 1]} : vector<8x3xf32> to vector<8x1xf32>
    %c0_1 = arith.constant 0 : index
    %c0_2 = arith.constant 0 : index
    %2 = vector.load %arg2[%c0_1, %c0_2] : memref<3x128xf32, #tpu.memory_space<vmem>>, vector<1x128xf32>
    %3 = vector.broadcast %1 : vector<8x1xf32> to vector<8x128xf32>
    %4 = vector.broadcast %2 : vector<1x128xf32> to vector<8x128xf32>
    %5 = arith.mulf %3, %4 : vector<8x128xf32>
    %6 = vector.extract_strided_slice %0 {offsets = [0, 1], sizes = [8, 1], strides = [1, 1]} : vector<8x3xf32> to vector<8x1xf32>
    %c1 = arith.constant 1 : index
    %c0_3 = arith.constant 0 : index
    %7 = vector.load %arg2[%c1, %c0_3] : memref<3x128xf32, #tpu.memory_space<vmem>>, vector<1x128xf32>
    %8 = vector.broadcast %6 : vector<8x1xf32> to vector<8x128xf32>
    %9 = vector.broadcast %7 : vector<1x128xf32> to vector<8x128xf32>
    %10 = arith.mulf %8, %9 : vector<8x128xf32>
    %11 = arith.addf %5, %10 : vector<8x128xf32>
    %12 = vector.extract_strided_slice %0 {offsets = [0, 2], sizes = [8, 1], strides = [1, 1]} : vector<8x3xf32> to vector<8x1xf32>
    %c2 = arith.constant 2 : index
    %c0_4 = arith.constant 0 : index
    %13 = vector.load %arg2[%c2, %c0_4] : memref<3x128xf32, #tpu.memory_space<vmem>>, vector<1x128xf32>
    %14 = vector.broadcast %12 : vector<8x1xf32> to vector<8x128xf32>
    %15 = vector.broadcast %13 : vector<1x128xf32> to vector<8x128xf32>
    %16 = arith.mulf %14, %15 : vector<8x128xf32>
    %17 = arith.addf %11, %16 : vector<8x128xf32>
    %c0_5 = arith.constant 0 : index
    %c0_6 = arith.constant 0 : index
    %18 = vector.load %arg3[%c0_5, %c0_6] : memref<1x128xf32, #tpu.memory_space<vmem>>, vector<1x128xf32>
    %19 = vector.broadcast %18 : vector<1x128xf32> to vector<8x128xf32>
    %20 = arith.addf %17, %19 : vector<8x128xf32>
    %cst = arith.constant 0.000000e+00 : f32
    %21 = vector.broadcast %cst : f32 to vector<8x128xf32>
    %22 = arith.maximumf %20, %21 : vector<8x128xf32>
    %c0_7 = arith.constant 0 : index
    %c0_8 = arith.constant 0 : index
    %23 = vector.load %arg4[%c0_7, %c0_8] : memref<128x128xf32, #tpu.memory_space<vmem>>, vector<128x128xf32>
    %cst_9 = arith.constant dense<0.000000e+00> : vector<8x128xf32>
    %24 = tpu.matmul %22, %23, %cst_9 {dimension_numbers = #tpu.dot_dimension_numbers<[1], [0], [0], [1], [0, 0, 1, 1], [], []>} : vector<8x128xf32>, vector<128x128xf32>, vector<8x128xf32> -> vector<8x128xf32>
    %c0_10 = arith.constant 0 : index
    %c0_11 = arith.constant 0 : index
    %25 = vector.load %arg5[%c0_10, %c0_11] : memref<1x128xf32, #tpu.memory_space<vmem>>, vector<1x128xf32>
    %26 = vector.broadcast %25 : vector<1x128xf32> to vector<8x128xf32>
    %27 = arith.addf %24, %26 : vector<8x128xf32>
    %cst_12 = arith.constant 0.000000e+00 : f32
    %28 = vector.broadcast %cst_12 : f32 to vector<8x128xf32>
    %29 = arith.maximumf %27, %28 : vector<8x128xf32>
    %c0_13 = arith.constant 0 : index
    %c0_14 = arith.constant 0 : index
    %30 = vector.load %arg6[%c0_13, %c0_14] : memref<128x128xf32, #tpu.memory_space<vmem>>, vector<128x128xf32>
    %cst_15 = arith.constant dense<0.000000e+00> : vector<8x128xf32>
    %31 = tpu.matmul %29, %30, %cst_15 {dimension_numbers = #tpu.dot_dimension_numbers<[1], [0], [0], [1], [0, 0, 1, 1], [], []>} : vector<8x128xf32>, vector<128x128xf32>, vector<8x128xf32> -> vector<8x128xf32>
    %c0_16 = arith.constant 0 : index
    %c0_17 = arith.constant 0 : index
    %32 = vector.load %arg7[%c0_16, %c0_17] : memref<1x128xf32, #tpu.memory_space<vmem>>, vector<1x128xf32>
    %33 = vector.broadcast %32 : vector<1x128xf32> to vector<8x128xf32>
    %34 = arith.addf %31, %33 : vector<8x128xf32>
    %c0_18 = arith.constant 0 : index
    %c0_19 = arith.constant 0 : index
    %35 = vector.load %arg8[%c0_18, %c0_19] : memref<8x128xf32, #tpu.memory_space<vmem>>, vector<8x128xf32>
    tpu.vector_store %arg8[%c0_18, %c0_19], %34 {strides = array<i32>} : memref<8x128xf32, #tpu.memory_space<vmem>>, vector<8x128xf32>,
    return
  }
  func.func @transform_0(%arg0: i32) -> (i32, i32) {
    %c0_i32 = arith.constant 0 : i32
    %c0_i32_0 = arith.constant 0 : i32
    return %arg0, %c0_i32 : i32, i32
  }
  func.func @transform_1(%arg0: i32) -> (i32, i32) {
    %c0_i32 = arith.constant 0 : i32
    %c0_i32_0 = arith.constant 0 : i32
    %c0_i32_1 = arith.constant 0 : i32
    return %c0_i32, %c0_i32_0 : i32, i32
  }
  func.func @transform_2(%arg0: i32) -> (i32, i32) {
    %c0_i32 = arith.constant 0 : i32
    %c0_i32_0 = arith.constant 0 : i32
    %c0_i32_1 = arith.constant 0 : i32
    return %c0_i32, %c0_i32_0 : i32, i32
  }
  func.func @transform_3(%arg0: i32) -> (i32, i32) {
    %c0_i32 = arith.constant 0 : i32
    %c0_i32_0 = arith.constant 0 : i32
    %c0_i32_1 = arith.constant 0 : i32
    return %c0_i32, %c0_i32_0 : i32, i32
  }
  func.func @transform_4(%arg0: i32) -> (i32, i32) {
    %c0_i32 = arith.constant 0 : i32
    %c0_i32_0 = arith.constant 0 : i32
    %c0_i32_1 = arith.constant 0 : i32
    return %c0_i32, %c0_i32_0 : i32, i32
  }
  func.func @transform_5(%arg0: i32) -> (i32, i32) {
    %c0_i32 = arith.constant 0 : i32
    %c0_i32_0 = arith.constant 0 : i32
    %c0_i32_1 = arith.constant 0 : i32
    return %c0_i32, %c0_i32_0 : i32, i32
  }
  func.func @transform_6(%arg0: i32) -> (i32, i32) {
    %c0_i32 = arith.constant 0 : i32
    %c0_i32_0 = arith.constant 0 : i32
    %c0_i32_1 = arith.constant 0 : i32
    return %c0_i32, %c0_i32_0 : i32, i32
  }
  func.func @transform_7(%arg0: i32) -> (i32, i32) {
    %c0_i32 = arith.constant 0 : i32
    %c0_i32_0 = arith.constant 0 : i32
    return %arg0, %c0_i32 : i32, i32
  }
}

</mosaic_0001>

<llo_original>
// kernel: tpu_custom_call.1
$region0: #{tpu_custom_call.1}
  #allocation0 [shape = 'u32[]', space=smem, size = 0x4, offset = 0x4, fixed_abs, tag = 'smem constant byte address 0x4 - core index']
  #allocation1 [shape = 'u32[72,128]{1,0:T(1,128)}', space=vmem, size = 0x9000, scoped, tag = 'internal scratch']
  %s0 = inlined_call_operand.vmem [shape: f32[8,3], index: 0, kind: input, shape index: {}]
  %s1 = inlined_call_operand.vmem [shape: f32[3,128], index: 1, kind: input, shape index: {}]
  %s2 = inlined_call_operand.vmem [shape: f32[1,128], index: 2, kind: input, shape index: {}]
  %s3 = inlined_call_operand.hbm [shape: f32[128,128], index: 3, kind: input, shape index: {}]
  %s4 = inlined_call_operand.vmem [shape: f32[1,128], index: 4, kind: input, shape index: {}]
  %s5 = inlined_call_operand.hbm [shape: f32[128,128], index: 5, kind: input, shape index: {}]
  %s6 = inlined_call_operand.vmem [shape: f32[1,128], index: 6, kind: input, shape index: {}]
  %s7 = inlined_call_operand.hbm [shape: f32[8,128], index: 7, kind: output, shape index: {}]
  %s8 = sld [smem:[#allocation0]]
  $region46: #{tpu_custom_call.1} parent=0
    _
  %s10 = ssub.s32 1, %s8
  %s11 = scalar_select 0, %s10, %s8
  $region1: #{tpu_custom_call.1} parent=0
    #allocation2 [shape = 'u8[65536]{0}', space=vmem, size = 0x10000, scoped, tag = 'input window, operand 3, single buffered']
    #allocation3 [shape = 's32[1]{0}', space=sflag, size = 0x4, scoped, tag = 'scoped memory for tpu_custom_call.1']
    #allocation4 [shape = 's32[1]{0}', space=sflag, size = 0x4, scoped, tag = 'scoped memory for tpu_custom_call.1']
    #allocation5 [shape = 'u8[65536]{0}', space=vmem, size = 0x10000, scoped, tag = 'input window, operand 5, single buffered']
    #allocation6 [shape = 's32[1]{0}', space=sflag, size = 0x4, scoped, tag = 'scoped memory for tpu_custom_call.1']
    #allocation7 [shape = 'u8[4096]{0}', space=vmem, size = 0x1000, scoped, tag = 'output window, operand 0, single buffered']
    %12 = vsyncpa [#allocation3], 0
    %13 = vsyncpa [#allocation6], 0
    %14 = vsyncpa [#allocation4], 0
    // Predicated region
    $region2: #{tpu_custom_call.1} parent=1 // pred_check
      _
    $region3: #{tpu_custom_call.1} parent=1 // pred_check_branch
      %16 = sbr.rel (0) target = $region5
    $region4: #{tpu_custom_call.1} parent=1 // pred_region
      _
    $region5: #{tpu_custom_call.1} parent=1 // pred_fallthru
      _
    // Predicated region
    $region6: #{tpu_custom_call.1} parent=1 // pred_check
      _
    $region7: #{tpu_custom_call.1} parent=1 // pred_check_branch
      %18 = sbr.rel (0) target = $region9
    $region8: #{tpu_custom_call.1} parent=1 // pred_region
      _
    $region9: #{tpu_custom_call.1} parent=1 // pred_fallthru
      _
    // Predicated region
    $region10: #{tpu_custom_call.1} parent=1 // pred_check
      _
    $region11: #{tpu_custom_call.1} parent=1 // pred_check_branch
      %20 = sbr.rel (0) target = $region13
    $region12: #{tpu_custom_call.1} parent=1 // pred_region
      _
    $region13: #{tpu_custom_call.1} parent=1 // pred_fallthru
      _
    // Predicated region
    $region14: #{tpu_custom_call.1} parent=1 // pred_check
      _
    $region15: #{tpu_custom_call.1} parent=1 // pred_check_branch
      %22 = sbr.rel (0) target = $region17
    $region16: #{tpu_custom_call.1} parent=1 // pred_region
      %24 = vsyncadd [#allocation3], 0
      %s25 = sshll.u32 %s3, 4
      %s26 = int_to_ptr.hbm [resolvable:$true] %s25
      %s27 = sshll.u32 [#allocation2], 4
      %s28 = int_to_ptr.vmem [resolvable:$true] %s27
      %33 = dma.hbm_to_vmem [thread:$0]  %s26, 2048, %s28, [#allocation3], 128, 128, 8
    $region17: #{tpu_custom_call.1} parent=1 // pred_fallthru
      _
    // Predicated region
    $region18: #{tpu_custom_call.1} parent=1 // pred_check
      _
    $region19: #{tpu_custom_call.1} parent=1 // pred_check_branch
      %35 = sbr.rel (0) target = $region21
    $region20: #{tpu_custom_call.1} parent=1 // pred_region
      _
    $region21: #{tpu_custom_call.1} parent=1 // pred_fallthru
      _
    // Predicated region
    $region22: #{tpu_custom_call.1} parent=1 // pred_check
      _
    $region23: #{tpu_custom_call.1} parent=1 // pred_check_branch
      %37 = sbr.rel (0) target = $region25
    $region24: #{tpu_custom_call.1} parent=1 // pred_region
      %39 = vsyncadd [#allocation6], 0
      %s40 = sshll.u32 %s5, 4
      %s41 = int_to_ptr.hbm [resolvable:$true] %s40
      %s42 = sshll.u32 [#allocation5], 4
      %s43 = int_to_ptr.vmem [resolvable:$true] %s42
      %48 = dma.hbm_to_vmem [thread:$0]  %s41, 2048, %s43, [#allocation6], 128, 128, 8
    $region25: #{tpu_custom_call.1} parent=1 // pred_fallthru
      _
    // Predicated region
    $region26: #{tpu_custom_call.1} parent=1 // pred_check
      _
    $region27: #{tpu_custom_call.1} parent=1 // pred_check_branch
      %50 = sbr.rel (0) target = $region29
    $region28: #{tpu_custom_call.1} parent=1 // pred_region
      _
    $region29: #{tpu_custom_call.1} parent=1 // pred_fallthru
      _
    // Predicated region
    $region30: #{tpu_custom_call.1} parent=1 // pred_check
      _
    $region31: #{tpu_custom_call.1} parent=1 // pred_check_branch
      %52 = sbr.rel (0) target = $region33
    $region32: #{tpu_custom_call.1} parent=1 // pred_region
      %54 = dma.done [#allocation3], 2048
    $region33: #{tpu_custom_call.1} parent=1 // pred_fallthru
      _
    // Predicated region
    $region34: #{tpu_custom_call.1} parent=1 // pred_check
      _
    $region35: #{tpu_custom_call.1} parent=1 // pred_check_branch
      %56 = sbr.rel (0) target = $region37
    $region36: #{tpu_custom_call.1} parent=1 // pred_region
      %58 = dma.done [#allocation6], 2048
    $region37: #{tpu_custom_call.1} parent=1 // pred_fallthru
      _
    %v59 = vld [vmem:[%s0] sm:$0xff]
    %v60 = vld [vmem:[%s1] sm:$0x1]
    %62 = vset.pattern.permute.xlu0 0
    %63 = vperm.xlu0 %62, %v59
    %v64 = vpop.permute.xlu0 %63
    %v66 = vperm.slane %v60, 0
    %v67 = vmul.f32 %v64, %v66
    %v68 = vld [vmem:[%s1 + $0x1] sm:$0x1]
    %69 = vset.pattern.permute.xlu0 1
    %70 = vperm.xlu0 %69, %v59
    %v71 = vpop.permute.xlu0 %70
    %v73 = vperm.slane %v68, 0
    %v74 = vmul.f32 %v71, %v73
    %v75 = vadd.f32 %v67, %v74
    %v76 = vld [vmem:[%s1 + $0x2] sm:$0x1]
    %77 = vset.pattern.permute.xlu0 2
    %78 = vperm.xlu0 %77, %v59
    %v79 = vpop.permute.xlu0 %78
    %v81 = vperm.slane %v76, 0
    %v82 = vmul.f32 %v79, %v81
    %v83 = vadd.f32 %v75, %v82
    %v84 = vld [vmem:[%s2] sm:$0x1]
    %v86 = vperm.slane %v84, 0
    %v88 = vadd.f32 %v83, %v86
    %v89 = vmax.f32 %v88, 0.0
    %v90 = vld [vmem:[#allocation2] sm:$0xff]
    %v91 = vld [vmem:[#allocation2 + $0x8] sm:$0xff]
    %v92 = vld [vmem:[#allocation2 + $0x10] sm:$0xff]
    %v93 = vld [vmem:[#allocation2 + $0x18] sm:$0xff]
    %v94 = vld [vmem:[#allocation2 + $0x20] sm:$0xff]
    %v95 = vld [vmem:[#allocation2 + $0x28] sm:$0xff]
    %v96 = vld [vmem:[#allocation2 + $0x30] sm:$0xff]
    %v97 = vld [vmem:[#allocation2 + $0x38] sm:$0xff]
    %v98 = vld [vmem:[#allocation2 + $0x40] sm:$0xff]
    %v99 = vld [vmem:[#allocation2 + $0x48] sm:$0xff]
    %v100 = vld [vmem:[#allocation2 + $0x50] sm:$0xff]
    %v101 = vld [vmem:[#allocation2 + $0x58] sm:$0xff]
    %v102 = vld [vmem:[#allocation2 + $0x60] sm:$0xff]
    %v103 = vld [vmem:[#allocation2 + $0x68] sm:$0xff]
    %v104 = vld [vmem:[#allocation2 + $0x70] sm:$0xff]
    %v105 = vld [vmem:[#allocation2 + $0x78] sm:$0xff]
    %v106 = vld [vmem:[%s4] sm:$0x1]
    %v108 = vperm.slane %v106, 0
    %110 = vmatpush.msra.mxu0 %v105
    %111 = vmatpush.msra.mxu0 %v104
    %112 = vmatpush.msra.mxu0 %v103
    %113 = vmatpush.msra.mxu0 %v102
    %114 = vmatpush.msra.mxu0 %v101
    %115 = vmatpush.msra.mxu0 %v100
    %116 = vmatpush.msra.mxu0 %v99
    %117 = vmatpush.msra.mxu0 %v98
    %118 = vmatpush.msra.mxu0 %v97
    %119 = vmatpush.msra.mxu0 %v96
    %120 = vmatpush.msra.mxu0 %v95
    %121 = vmatpush.msra.mxu0 %v94
    %122 = vmatpush.msra.mxu0 %v93
    %123 = vmatpush.msra.mxu0 %v92
    %124 = vmatpush.msra.mxu0 %v91
    %125 = vmatpush.msra.mxu0 %v90
    %126 = vmatmul.f32.gmra.mxu0 %v89
    %v127 = vpop.f32.mrf.mxu0
    %v128 = vadd.f32 %v108, %v127
    %129 = vdwg.mxu0
    %v130 = vmax.f32 %v128, 0.0
    %v131 = vld [vmem:[#allocation5] sm:$0xff]
    %v132 = vld [vmem:[#allocation5 + $0x8] sm:$0xff]
    %v133 = vld [vmem:[#allocation5 + $0x10] sm:$0xff]
    %v134 = vld [vmem:[#allocation5 + $0x18] sm:$0xff]
    %v135 = vld [vmem:[#allocation5 + $0x20] sm:$0xff]
    %v136 = vld [vmem:[#allocation5 + $0x28] sm:$0xff]
    %v137 = vld [vmem:[#allocation5 + $0x30] sm:$0xff]
    %v138 = vld [vmem:[#allocation5 + $0x38] sm:$0xff]
    %v139 = vld [vmem:[#allocation5 + $0x40] sm:$0xff]
    %v140 = vld [vmem:[#allocation5 + $0x48] sm:$0xff]
    %v141 = vld [vmem:[#allocation5 + $0x50] sm:$0xff]
    %v142 = vld [vmem:[#allocation5 + $0x58] sm:$0xff]
    %v143 = vld [vmem:[#allocation5 + $0x60] sm:$0xff]
    %v144 = vld [vmem:[#allocation5 + $0x68] sm:$0xff]
    %v145 = vld [vmem:[#allocation5 + $0x70] sm:$0xff]
    %v146 = vld [vmem:[#allocation5 + $0x78] sm:$0xff]
    %v147 = vld [vmem:[%s6] sm:$0x1]
    %v149 = vperm.slane %v147, 0
    %151 = vmatpush.msra.mxu0 %v146
    %152 = vmatpush.msra.mxu0 %v145
    %153 = vmatpush.msra.mxu0 %v144
    %154 = vmatpush.msra.mxu0 %v143
    %155 = vmatpush.msra.mxu0 %v142
    %156 = vmatpush.msra.mxu0 %v141
    %157 = vmatpush.msra.mxu0 %v140
    %158 = vmatpush.msra.mxu0 %v139
    %159 = vmatpush.msra.mxu0 %v138
    %160 = vmatpush.msra.mxu0 %v137
    %161 = vmatpush.msra.mxu0 %v136
    %162 = vmatpush.msra.mxu0 %v135
    %163 = vmatpush.msra.mxu0 %v134
    %164 = vmatpush.msra.mxu0 %v133
    %165 = vmatpush.msra.mxu0 %v132
    %166 = vmatpush.msra.mxu0 %v131
    %167 = vmatmul.f32.gmra.mxu0 %v130
    %v168 = vpop.f32.mrf.mxu0
    %v169 = vadd.f32 %v149, %v168
    %170 = vdwg.mxu0
    %171 = vst [vmem:[#allocation7] sm:$0xff] %v169
    // Predicated region
    $region38: #{tpu_custom_call.1} parent=1 // pred_check
      _
    $region39: #{tpu_custom_call.1} parent=1 // pred_check_branch
      %173 = sbr.rel (0) target = $region41
    $region40: #{tpu_custom_call.1} parent=1 // pred_region
      %175 = vsyncadd [#allocation4], 0
      %s177 = sshll.u32 [#allocation7], 4
      %s178 = int_to_ptr.vmem [resolvable:$true] %s177
      %s179 = sshll.u32 %s7, 4
      %s180 = int_to_ptr.hbm [resolvable:$true] %s179
      %182 = dma.vmem_to_hbm [thread:$0]  %s178, 128, %s180, [#allocation4]
    $region41: #{tpu_custom_call.1} parent=1 // pred_fallthru
      _
    // Predicated region
    $region42: #{tpu_custom_call.1} parent=1 // pred_check
      _
    $region43: #{tpu_custom_call.1} parent=1 // pred_check_branch
      %184 = sbr.rel (0) target = $region45
    $region44: #{tpu_custom_call.1} parent=1 // pred_region
      %186 = dma.done [#allocation4], 128
    $region45: #{tpu_custom_call.1} parent=1 // pred_fallthru
      _
    %187 = vsyncpa [#allocation3], 1
    %188 = vsyncpa [#allocation6], 1
    %189 = vsyncpa [#allocation4], 1

</llo_original>
